<compile_context>
chip_gen: v6e
topology: v6e:2x2x1
jax: 0.10.0
libtpu: 0.0.40
codegen_flags: <defaults>
</compile_context>

<pallas_src>
import functools

import jax
import jax.numpy as jnp
from jax.experimental import pallas as pl
from jax.experimental.pallas import tpu as pltpu


def _camera_kernel(m_ref, pts_ref, out_ref):
    """One point slab: world = (scale*M[:2,:]) @ [px, py, 1].

    m_ref:   (2, 3) f32 in SMEM  -- scale already folded in
    pts_ref: (2, tile_r, 128) f32 in VMEM -- [0] = px slab, [1] = py slab
    out_ref: (2, tile_r, 128) f32 in VMEM -- [0] = world x, [1] = world y
    """
    px = pts_ref[0]                      # (tile_r, 128), sublane+lane dense
    py = pts_ref[1]
    # Row i of (scale*M[:2]) @ [px, py, 1] = m[i,0]*px + m[i,1]*py + m[i,2]
    out_ref[0] = m_ref[0, 0] * px + m_ref[0, 1] * py + m_ref[0, 2]
    out_ref[1] = m_ref[1, 0] * px + m_ref[1, 1] * py + m_ref[1, 2]


@functools.partial(jax.jit, static_argnames=("tile_rows",))
def camera_to_camera_batched(invProj_matrix, points_xy, scale, *, tile_rows=1024):
    """Batched cameraToCamera on SoA points.

    points_xy: (2, N) f32, row 0 = px, row 1 = py.
    Returns (2, N) f32 world coords (row 0 = wx, row 1 = wy).

    Zero extra HBM passes when N % 128 == 0 (the reshape to (2, N/128, 128) is
    free); otherwise a single small pad copy is taken on the tail.
    """
    # Fold scale into the top-2 rows of the matrix (6 floats, host-side, free).
    m2 = jnp.asarray(scale, jnp.float32) * jnp.asarray(invProj_matrix, jnp.float32)[:2, :]
    pts = jnp.asarray(points_xy, jnp.float32)
    n = pts.shape[1]

    rem = n % 128
    if rem:
        pts = jnp.pad(pts, ((0, 0), (0, 128 - rem)))  # fallback only; aligned N is zero-copy
    n_pad = pts.shape[1]
    rows = n_pad // 128

    pts3 = pts.reshape(2, rows, 128)      # free row-major reshape (no data movement)

    if rows <= tile_rows:
        tile_r = rows                     # block == full extent -> always a legal block shape
    else:
        tile_r = max(8, (tile_rows // 8) * 8)   # keep (8,128)-aligned tiles for dense vregs
    grid = pl.cdiv(rows, tile_r)          # ragged last block handled by Pallas

    out = pl.pallas_call(
        _camera_kernel,
        out_shape=jax.ShapeDtypeStruct((2, rows, 128), jnp.float32),
        grid_spec=pltpu.PrefetchScalarGridSpec(
            num_scalar_prefetch=0,
            grid=(grid,),
            in_specs=[
                pl.BlockSpec(memory_space=pltpu.MemorySpace.SMEM),    # (2,3) scaled matrix
                pl.BlockSpec((2, tile_r, 128), lambda i: (0, i, 0)),  # point slab
                # If DMA latency is ever exposed at very large N, deepen the
                # pipeline here with pipeline_mode=pl.Buffered(3) instead of
                # shrinking tiles.
            ],
            out_specs=pl.BlockSpec((2, tile_r, 128), lambda i: (0, i, 0)),
        ),
        compiler_params=pltpu.CompilerParams(
            dimension_semantics=("parallel",),   # shard slabs across v7x's 2 TensorCores
        ),
    )(m2, pts3)

    out = out.reshape(2, n_pad)           # free reshape back to (2, N_pad)
    return out[:, :n] if rem else out


def camera_to_camera(invProj_matrix, point, scale):
    """Exact cameraToCamera.forward semantics: point (2,) -> (2, 1).

    Plain jnp on purpose: a single 3x3 matvec is microseconds of launch
    overhead for nanoseconds of math if routed through a Pallas custom call.
    """
    m = jnp.asarray(invProj_matrix, jnp.float32)
    p = jnp.asarray(point, jnp.float32)
    s = jnp.asarray(scale, jnp.float32)
    wx = s * (m[0, 0] * p[0] + m[0, 1] * p[1] + m[0, 2])
    wy = s * (m[1, 0] * p[0] + m[1, 1] * p[1] + m[1, 2])
    return jnp.stack([wx, wy]).reshape(2, 1)


# ----------------------------- references ---------------------------------

def _reference_single(invProj_matrix, point, scale):
    x = jnp.array([[point[0]], [point[1]], [1.0]], dtype=jnp.float32)
    worldpt = jnp.asarray(scale, jnp.float32) * jnp.dot(
        invProj_matrix.astype(jnp.float32), x, precision=jax.lax.Precision.HIGHEST)
    return worldpt[0:-1, :]


def _reference_batched_soa(invProj_matrix, points_xy, scale):
    m = invProj_matrix.astype(jnp.float32)
    s = jnp.asarray(scale, jnp.float32)
    px = points_xy[0].astype(jnp.float32)
    py = points_xy[1].astype(jnp.float32)
    wx = s * (m[0, 0] * px + m[0, 1] * py + m[0, 2])
    wy = s * (m[1, 0] * px + m[1, 1] * py + m[1, 2])
    return jnp.stack([wx, wy], axis=0)


if __name__ == "__main__":
    key = jax.random.PRNGKey(0)
    k1, k2, k3, k4 = jax.random.split(key, 4)

    # deterministic synthetic "parameters"/inputs (no checkpoint loading)
    invProj_matrix = jax.random.normal(k1, (3, 3), dtype=jnp.float32)
    scale = jnp.float32(2.5)

    # --- single-point path (original module forward; plain jnp, no Pallas) ---
    point = jax.random.normal(k2, (2,), dtype=jnp.float32)
    out1 = jax.block_until_ready(camera_to_camera(invProj_matrix, point, scale))
    ref1 = _reference_single(invProj_matrix, point, scale)
    assert out1.shape == (2, 1), out1.shape
    assert jnp.allclose(out1, ref1, atol=1e-4, rtol=1e-4), (out1, ref1)

    # --- batched Pallas path: aligned N, multi-step grid (tile_rows=16 -> 4 steps) ---
    n = 128 * 64                                    # 8192 points, zero-copy layout
    pts = jax.random.normal(k3, (2, n), dtype=jnp.float32)
    out_b = jax.block_until_ready(
        camera_to_camera_batched(invProj_matrix, pts, scale, tile_rows=16))
    ref_b = _reference_batched_soa(invProj_matrix, pts, scale)
    assert out_b.shape == (2, n), out_b.shape
    assert jnp.allclose(out_b, ref_b, atol=1e-4, rtol=1e-4)

    # --- ragged N (exercises the pad fallback + single full-extent block) ---
    n2 = 1000
    pts2 = jax.random.normal(k4, (2, n2), dtype=jnp.float32)
    out_r = jax.block_until_ready(
        camera_to_camera_batched(invProj_matrix, pts2, scale))
    ref_r = _reference_batched_soa(invProj_matrix, pts2, scale)
    assert out_r.shape == (2, n2), out_r.shape
    assert jnp.allclose(out_r, ref_r, atol=1e-4, rtol=1e-4)

    print("KERNEL_OK")
</pallas_src>

<mosaic_0001>
module attributes {stable_mosaic.version = 11 : i64} {
  func.func @_camera_kernel(%arg0: i32, %arg1: memref<2x3xf32, #tpu.memory_space<smem>>, %arg2: memref<2x16x128xf32, #tpu.memory_space<vmem>>, %arg3: memref<2x16x128xf32, #tpu.memory_space<vmem>>) attributes {dimension_semantics = [#tpu.dimension_semantics<parallel>], iteration_bounds = array<i64: 4>, scalar_prefetch = 0 : i64, scratch_operands = 0 : i64, tpu.core_type = #tpu.core_type<tc>, window_params = [{transform_indices = @transform_0, window_bounds = array<i64: 2, 3>}, {transform_indices = @transform_1, window_bounds = array<i64: 2, 16, 128>}, {transform_indices = @transform_2, window_bounds = array<i64: 2, 16, 128>}]} {
    %c0 = arith.constant 0 : index
    %c0_0 = arith.constant 0 : index
    %c0_1 = arith.constant 0 : index
    %0 = vector.load %arg2[%c0, %c0_0, %c0_1] : memref<2x16x128xf32, #tpu.memory_space<vmem>>, vector<1x16x128xf32>
    %1 = vector.shape_cast %0 : vector<1x16x128xf32> to vector<16x128xf32>
    %c1 = arith.constant 1 : index
    %c0_2 = arith.constant 0 : index
    %c0_3 = arith.constant 0 : index
    %2 = vector.load %arg2[%c1, %c0_2, %c0_3] : memref<2x16x128xf32, #tpu.memory_space<vmem>>, vector<1x16x128xf32>
    %3 = vector.shape_cast %2 : vector<1x16x128xf32> to vector<16x128xf32>
    %c0_4 = arith.constant 0 : index
    %c0_5 = arith.constant 0 : index
    %4 = memref.load %arg1[%c0_4, %c0_5] : memref<2x3xf32, #tpu.memory_space<smem>>
    %5 = vector.broadcast %4 : f32 to vector<16x128xf32>
    %6 = arith.mulf %5, %1 : vector<16x128xf32>
    %c0_6 = arith.constant 0 : index
    %c1_7 = arith.constant 1 : index
    %7 = memref.load %arg1[%c0_6, %c1_7] : memref<2x3xf32, #tpu.memory_space<smem>>
    %8 = vector.broadcast %7 : f32 to vector<16x128xf32>
    %9 = arith.mulf %8, %3 : vector<16x128xf32>
    %10 = arith.addf %6, %9 : vector<16x128xf32>
    %c0_8 = arith.constant 0 : index
    %c2 = arith.constant 2 : index
    %11 = memref.load %arg1[%c0_8, %c2] : memref<2x3xf32, #tpu.memory_space<smem>>
    %12 = vector.broadcast %11 : f32 to vector<16x128xf32>
    %13 = arith.addf %10, %12 : vector<16x128xf32>
    %c0_9 = arith.constant 0 : index
    %c0_10 = arith.constant 0 : index
    %c0_11 = arith.constant 0 : index
    %14 = vector.load %arg3[%c0_9, %c0_10, %c0_11] : memref<2x16x128xf32, #tpu.memory_space<vmem>>, vector<1x16x128xf32>
    %15 = vector.shape_cast %14 : vector<1x16x128xf32> to vector<16x128xf32>
    %16 = vector.shape_cast %13 : vector<16x128xf32> to vector<1x16x128xf32>
    tpu.vector_store %arg3[%c0_9, %c0_10, %c0_11], %16 {strides = array<i32>} : memref<2x16x128xf32, #tpu.memory_space<vmem>>, vector<1x16x128xf32>,
    %c1_12 = arith.constant 1 : index
    %c0_13 = arith.constant 0 : index
    %17 = memref.load %arg1[%c1_12, %c0_13] : memref<2x3xf32, #tpu.memory_space<smem>>
    %18 = vector.broadcast %17 : f32 to vector<16x128xf32>
    %19 = arith.mulf %18, %1 : vector<16x128xf32>
    %c1_14 = arith.constant 1 : index
    %c1_15 = arith.constant 1 : index
    %20 = memref.load %arg1[%c1_14, %c1_15] : memref<2x3xf32, #tpu.memory_space<smem>>
    %21 = vector.broadcast %20 : f32 to vector<16x128xf32>
    %22 = arith.mulf %21, %3 : vector<16x128xf32>
    %23 = arith.addf %19, %22 : vector<16x128xf32>
    %c1_16 = arith.constant 1 : index
    %c2_17 = arith.constant 2 : index
    %24 = memref.load %arg1[%c1_16, %c2_17] : memref<2x3xf32, #tpu.memory_space<smem>>
    %25 = vector.broadcast %24 : f32 to vector<16x128xf32>
    %26 = arith.addf %23, %25 : vector<16x128xf32>
    %c1_18 = arith.constant 1 : index
    %c0_19 = arith.constant 0 : index
    %c0_20 = arith.constant 0 : index
    %27 = vector.load %arg3[%c1_18, %c0_19, %c0_20] : memref<2x16x128xf32, #tpu.memory_space<vmem>>, vector<1x16x128xf32>
    %28 = vector.shape_cast %27 : vector<1x16x128xf32> to vector<16x128xf32>
    %29 = vector.shape_cast %26 : vector<16x128xf32> to vector<1x16x128xf32>
    tpu.vector_store %arg3[%c1_18, %c0_19, %c0_20], %29 {strides = array<i32>} : memref<2x16x128xf32, #tpu.memory_space<vmem>>, vector<1x16x128xf32>,
    return
  }
  func.func @transform_0(%arg0: i32) -> (i32, i32) {
    %c0_i32 = arith.constant 0 : i32
    %c0_i32_0 = arith.constant 0 : i32
    %c0_i32_1 = arith.constant 0 : i32
    return %c0_i32, %c0_i32_0 : i32, i32
  }
  func.func @transform_1(%arg0: i32) -> (i32, i32, i32) {
    %c0_i32 = arith.constant 0 : i32
    %c0_i32_0 = arith.constant 0 : i32
    %c0_i32_1 = arith.constant 0 : i32
    return %c0_i32, %arg0, %c0_i32_0 : i32, i32, i32
  }
  func.func @transform_2(%arg0: i32) -> (i32, i32, i32) {
    %c0_i32 = arith.constant 0 : i32
    %c0_i32_0 = arith.constant 0 : i32
    %c0_i32_1 = arith.constant 0 : i32
    return %c0_i32, %arg0, %c0_i32_0 : i32, i32, i32
  }
}

</mosaic_0001>

<llo_original>
// kernel: camera_to_camera_batched.1
$region0: #{camera_to_camera_batched.1}
  #allocation0 [shape = 'u32[]', space=smem, size = 0x4, offset = 0x4, fixed_abs, tag = 'smem constant byte address 0x4 - core index']
  #allocation1 [shape = 'u32[144,128]{1,0:T(1,128)}', space=vmem, size = 0x12000, scoped, tag = 'internal scratch']
  %s0 = inlined_call_operand.vmem [shape: f32[2,3], index: 0, kind: input, shape index: {}]
  %s1 = inlined_call_operand.vmem [shape: f32[2,64,128], index: 1, kind: input, shape index: {}]
  %s2 = inlined_call_operand.vmem [shape: f32[2,64,128], index: 2, kind: output, shape index: {}]
  %s3 = sld [smem:[#allocation0]]
  $region117: #{camera_to_camera_batched.1} parent=0
    _
  %s5 = ssub.s32 1, %s3
  %s6 = scalar_select 0, %s5, %s3
  $region1: #{camera_to_camera_batched.1} parent=0
    #allocation2 [shape = 'u8[1024]{0}', space=smem, size = 0x400, scoped, tag = 'input window, operand 0, single buffered']
    #allocation3 [shape = 's32[2]{0}', space=sflag, size = 0x8, scoped, tag = 'scoped memory for camera_to_camera_batched.1']
    #allocation4 [shape = 'u8[32768]{0}', space=vmem, size = 0x8000, scoped, tag = 'input window, operand 1']
    #allocation5 [shape = 'u8[32768]{0}', space=vmem, size = 0x8000, scoped, tag = 'output window, operand 0']
    %7 = vsyncpa [#allocation3], 0
    loop: start=0, step=1, limit=6
    $region2: #{camera_to_camera_batched.1} parent=1 // loop_pre_header
      _
    $region3: #{camera_to_camera_batched.1} parent=1 // loop_header
      %s9 = sphi 0, %s13
      %p10 = scmp.ge.s32.totalorder %s9, 6
      %s17 = sphi 0, %s17
      %s19 = sphi 0, %s17
      %s20 = sphi 0, %s19
      %s34 = sphi 0, %s20
      %s40 = sphi 0, %s42
      %s43 = sphi 0, %s40
      %s44 = sphi 0, %s43
      %s60 = sphi 0, %s44
      %s66 = sphi 0, %s68
      %s69 = sphi 0, %s66
      %s70 = sphi 0, %s69
      %s86 = sphi 0, %s70
    $region4: #{camera_to_camera_batched.1} parent=1 // loop_header_branch
      %12 = sbr.rel (%p10) target = $region8
    $region5: #{camera_to_camera_batched.1} parent=1 // loop_body
      %s14 = ssub.s32 %s9, 1
      %s15 = ssub.s32 %s9, 2
      %s16 = sadd.s32 %s9, 1
      %s18 = sadd.s32 %s17, 1
      %p21 = scmp.eq.s32.totalorder %s9, 3
      %p22 = scmp.ne.s32.totalorder %s17, %s19
      %p23 = scmp.eq.s32.totalorder %s9, 0
      %p24 = por %p22, %p23
      %p25 = scmp.ne.s32.totalorder %s17, %s19
      %p26 = scmp.eq.s32.totalorder %s14, 3
      %p27 = por %p25, %p26
      %p28 = scmp.ne.s32.totalorder %s19, %s20
      %p29 = scmp.eq.s32.totalorder %s14, 0
      %p30 = por %p28, %p29
      %p31 = scmp.ne.s32.totalorder %s19, %s20
      %p32 = scmp.eq.s32.totalorder %s15, 3
      %p33 = por %p31, %p32
      %p35 = scmp.ne.s32.totalorder %s20, %s34
      %p36 = scmp.eq.s32.totalorder %s15, 0
      %p37 = por %p35, %p36
      %s38 = ssub.s32 %s9, %s16
      %p39 = scmp.eq.s32.totalorder %s38, 0
      %s41 = sadd.s32 %s40, 1
      %s42 = scalar_select %p39, %s40, %s41
      %p45 = pneg %p39
      %p46 = scmp.eq.s32.totalorder %s9, 3
      %p47 = por %p45, %p46
      %p48 = scmp.ne.s32.totalorder %s40, %s43
      %p49 = scmp.eq.s32.totalorder %s9, 0
      %p50 = por %p48, %p49
      %p51 = scmp.ne.s32.totalorder %s40, %s43
      %p52 = scmp.eq.s32.totalorder %s14, 3
      %p53 = por %p51, %p52
      %p54 = scmp.ne.s32.totalorder %s43, %s44
      %p55 = scmp.eq.s32.totalorder %s14, 0
      %p56 = por %p54, %p55
      %p57 = scmp.ne.s32.totalorder %s43, %s44
      %p58 = scmp.eq.s32.totalorder %s15, 3
      %p59 = por %p57, %p58
      %p61 = scmp.ne.s32.totalorder %s44, %s60
      %p62 = scmp.eq.s32.totalorder %s15, 0
      %p63 = por %p61, %p62
      %s64 = ssub.s32 %s9, %s16
      %p65 = scmp.eq.s32.totalorder %s64, 0
      %s67 = sadd.s32 %s66, 1
      %s68 = scalar_select %p65, %s66, %s67
      %p71 = pneg %p65
      %p72 = scmp.eq.s32.totalorder %s9, 3
      %p73 = por %p71, %p72
      %p74 = scmp.ne.s32.totalorder %s66, %s69
      %p75 = scmp.eq.s32.totalorder %s9, 0
      %p76 = por %p74, %p75
      %p77 = scmp.ne.s32.totalorder %s66, %s69
      %p78 = scmp.eq.s32.totalorder %s14, 3
      %p79 = por %p77, %p78
      %p80 = scmp.ne.s32.totalorder %s69, %s70
      %p81 = scmp.eq.s32.totalorder %s14, 0
      %p82 = por %p80, %p81
      %p83 = scmp.ne.s32.totalorder %s69, %s70
      %p84 = scmp.eq.s32.totalorder %s15, 3
      %p85 = por %p83, %p84
      %p87 = scmp.ne.s32.totalorder %s70, %s86
      %p88 = scmp.eq.s32.totalorder %s15, 0
      %p89 = por %p87, %p88
      %p90 = scmp.le.s32.totalorder 1, %s9
      %p91 = scmp.lt.s32.totalorder %s9, 5
      %p92 = pnand %p90, %p91
      %p93 = pneg %p92
      // Predicated region
      $region9: #{camera_to_camera_batched.1} parent=5 // pred_check
        _
      $region10: #{camera_to_camera_batched.1} parent=5 // pred_check_branch
        %95 = sbr.rel (%p92) target = $region12
      $region11: #{camera_to_camera_batched.1} parent=5 // pred_region
        %s96 = ssub.s32 %s9, 1
        // Predicated region
        $region13: #{camera_to_camera_batched.1} parent=11 // pred_check
          %p97 = pneg %p30
        $region14: #{camera_to_camera_batched.1} parent=11 // pred_check_branch
          %99 = sbr.rel (%p97) target = $region16
        $region15: #{camera_to_camera_batched.1} parent=11 // pred_region
          %s101 = ssub.s32 32, 32
          %102 = vsyncadd [#allocation3], %s101
          %s104 = sshll.u32 %s0, 4
          %s105 = int_to_ptr.vmem [resolvable:$true] %s104
          %107 = dma.vmem_to_smem %s105, 32, [#allocation2], [#allocation3]
        $region16: #{camera_to_camera_batched.1} parent=11 // pred_fallthru
          _
      $region12: #{camera_to_camera_batched.1} parent=5 // pred_fallthru
        _
      %p108 = scmp.lt.s32.totalorder %s9, 4
      // Predicated region
      $region17: #{camera_to_camera_batched.1} parent=5 // pred_check
        %p109 = pneg %p108
      $region18: #{camera_to_camera_batched.1} parent=5 // pred_check_branch
        %111 = sbr.rel (%p109) target = $region20
      $region19: #{camera_to_camera_batched.1} parent=5 // pred_region
        // Predicated region
        $region21: #{camera_to_camera_batched.1} parent=19 // pred_check
          %p112 = pneg %p50
        $region22: #{camera_to_camera_batched.1} parent=19 // pred_check_branch
          %114 = sbr.rel (%p112) target = $region24
        $region23: #{camera_to_camera_batched.1} parent=19 // pred_region
          %s115 = sand.u32 %s40, 1
          %s116 = sand.u32 %s40, 1
          %s117 = smul.addr %s116, 32
          %s118 = scalar_lea.vmem [#allocation4], %s117
          %s119 = smul.u32 2, %s9
          %s120 = smul.addr %s119, 8
          %s121 = scalar_lea.vmem %s1, %s120
          // Predicated region
          $region25: #{camera_to_camera_batched.1} parent=23 // pred_check
            _
          $region26: #{camera_to_camera_batched.1} parent=23 // pred_check_branch
            %123 = sbr.rel (0) target = $region28
          $region27: #{camera_to_camera_batched.1} parent=23 // pred_region
            // Predicated region
            $region29: #{camera_to_camera_batched.1} parent=27 // pred_check
              _
            $region30: #{camera_to_camera_batched.1} parent=27 // pred_check_branch
              %125 = sbr.rel (0) target = $region32
            $region31: #{camera_to_camera_batched.1} parent=27 // pred_region
              // Predicated region
              $region44: #{camera_to_camera_batched.1} parent=31 // pred_check
                _
              $region45: #{camera_to_camera_batched.1} parent=31 // pred_check_branch
                %147 = sbr.rel (0) target = $region47
              $region46: #{camera_to_camera_batched.1} parent=31 // pred_region
                loop: start=0, step=1, limit=1
                $region48: #{camera_to_camera_batched.1} parent=46 // loop_pre_header
                  _
                $region49: #{camera_to_camera_batched.1} parent=46 // loop_header
                  %s149 = sphi 0, %s153
                  %p150 = scmp.ge.s32.totalorder %s149, 1
                  %s154 = sphi %s121, %s121
                  %s155 = sphi %s118, %s118
                $region50: #{camera_to_camera_batched.1} parent=46 // loop_header_branch
                  %152 = sbr.rel (%p150) target = $region54
                $region51: #{camera_to_camera_batched.1} parent=46 // loop_body
                  %v156 = vld [vmem:[%s154] sm:$0xff]
                  %157 = vst [vmem:[%s155] sm:$0xff] %v156
                  %v158 = vld [vmem:[%s154 + $0x8] sm:$0xff]
                  %159 = vst [vmem:[%s155 + $0x8] sm:$0xff] %v158
                  %v160 = vld [vmem:[%s154 + $0x40] sm:$0xff]
                  %161 = vst [vmem:[%s155 + $0x10] sm:$0xff] %v160
                  %v162 = vld [vmem:[%s154 + $0x48] sm:$0xff]
                  %163 = vst [vmem:[%s155 + $0x18] sm:$0xff] %v162
                $region52: #{camera_to_camera_batched.1} parent=46 // loop_footer
                  %s153 = sadd.s32 1, %s149
                $region53: #{camera_to_camera_batched.1} parent=46 // loop_footer_branch
                  %148 = sbr.rel target = $region49
                $region54: #{camera_to_camera_batched.1} parent=46 // loop_exit
                  _
              $region47: #{camera_to_camera_batched.1} parent=31 // pred_fallthru
                _
              // Predicated region
              $region55: #{camera_to_camera_batched.1} parent=31 // pred_check
                _
              $region56: #{camera_to_camera_batched.1} parent=31 // pred_check_branch
                %165 = sbr.rel target = $region58
              $region57: #{camera_to_camera_batched.1} parent=31 // pred_region
                _
              $region58: #{camera_to_camera_batched.1} parent=31 // pred_fallthru
                _
            $region32: #{camera_to_camera_batched.1} parent=27 // pred_fallthru
              _
            // Predicated region
            $region33: #{camera_to_camera_batched.1} parent=27 // pred_check
              _
            $region34: #{camera_to_camera_batched.1} parent=27 // pred_check_branch
              %127 = sbr.rel target = $region36
            $region35: #{camera_to_camera_batched.1} parent=27 // pred_region
              %s129 = ssub.s32 256, 1
              loop: start=0, step=1, limit=1
              $region37: #{camera_to_camera_batched.1} parent=35 // loop_pre_header
                _
              $region38: #{camera_to_camera_batched.1} parent=35 // loop_header
                %s131 = sphi 0, %s135
                %p132 = scmp.ge.s32.totalorder %s131, 1
                %s136 = sphi %s121, %s121
                %s137 = sphi %s118, %s118
              $region39: #{camera_to_camera_batched.1} parent=35 // loop_header_branch
                %134 = sbr.rel (%p132) target = $region43
              $region40: #{camera_to_camera_batched.1} parent=35 // loop_body
                %v138 = vld [vmem:[%s136] sm:%s129]
                %139 = vst [vmem:[%s137] sm:%s129] %v138
                %v140 = vld [vmem:[%s136 + $0x8] sm:%s129]
                %141 = vst [vmem:[%s137 + $0x8] sm:%s129] %v140
                %v142 = vld [vmem:[%s136 + $0x40] sm:%s129]
                %143 = vst [vmem:[%s137 + $0x10] sm:%s129] %v142
                %v144 = vld [vmem:[%s136 + $0x48] sm:%s129]
                %145 = vst [vmem:[%s137 + $0x18] sm:%s129] %v144
              $region41: #{camera_to_camera_batched.1} parent=35 // loop_footer
                %s135 = sadd.s32 1, %s131
              $region42: #{camera_to_camera_batched.1} parent=35 // loop_footer_branch
                %130 = sbr.rel target = $region38
              $region43: #{camera_to_camera_batched.1} parent=35 // loop_exit
                _
            $region36: #{camera_to_camera_batched.1} parent=27 // pred_fallthru
              _
          $region28: #{camera_to_camera_batched.1} parent=23 // pred_fallthru
            _
          %166 = vnop
        $region24: #{camera_to_camera_batched.1} parent=19 // pred_fallthru
          _
      $region20: #{camera_to_camera_batched.1} parent=5 // pred_fallthru
        _
      %p167 = scmp.le.s32.totalorder 1, %s9
      %p168 = scmp.lt.s32.totalorder %s9, 5
      %p169 = pnand %p167, %p168
      %p170 = pneg %p169
      // Predicated region
      $region59: #{camera_to_camera_batched.1} parent=5 // pred_check
        _
      $region60: #{camera_to_camera_batched.1} parent=5 // pred_check_branch
        %172 = sbr.rel (%p169) target = $region62
      $region61: #{camera_to_camera_batched.1} parent=5 // pred_region
        %s173 = ssub.s32 %s9, 1
        // Predicated region
        $region63: #{camera_to_camera_batched.1} parent=61 // pred_check
          %p174 = pneg %p30
        $region64: #{camera_to_camera_batched.1} parent=61 // pred_check_branch
          %176 = sbr.rel (%p174) target = $region66
        $region65: #{camera_to_camera_batched.1} parent=61 // pred_region
          %177 = dma.done [#allocation3], 32
        $region66: #{camera_to_camera_batched.1} parent=61 // pred_fallthru
          _
        %s178 = sand.u32 %s43, 1
        %s179 = sand.u32 %s43, 1
        %s180 = smul.addr %s179, 32
        %s181 = scalar_lea.vmem [#allocation4], %s180
        // Predicated region
        $region67: #{camera_to_camera_batched.1} parent=61 // pred_check
          %p182 = pneg %p56
        $region68: #{camera_to_camera_batched.1} parent=61 // pred_check_branch
          %184 = sbr.rel (%p182) target = $region70
        $region69: #{camera_to_camera_batched.1} parent=61 // pred_region
          _
        $region70: #{camera_to_camera_batched.1} parent=61 // pred_fallthru
          _
        %185 = sfence
        %p186 = pneg %p30
        %p187 = pneg %p27
        %s188 = sand.u32 %s43, 1
        %s189 = sand.u32 %s43, 1
        %s190 = smul.addr %s189, 32
        %s191 = scalar_lea.vmem [#allocation4], %s190
        %p192 = pneg %p56
        %p193 = pneg %p53
        %p194 = pneg %p82
        %p195 = pneg %p79
        %s196 = sand.u32 %s69, 1
        %s197 = sand.u32 %s69, 1
        %s198 = smul.addr %s197, 32
        %s199 = scalar_lea.vmem [#allocation5], %s198
        %s200 = smul.u32 2, %s14
        %s201 = smul.u32 2, %s14
        %v202 = vld [vmem:[%s181] sm:$0xff]
        %v203 = vld [vmem:[%s181 + $0x8] sm:$0xff]
        %s204 = scalar_lea.vmem %s181, 16 [#allocation4]
        %v205 = vld [vmem:[%s204] sm:$0xff]
        %v206 = vld [vmem:[%s204 + $0x8] sm:$0xff]
        %s207 = sld [smem:[#allocation2]]
        %v208 = vstv %s207
        %v209 = vmul.f32 %v208, %v202
        %v210 = vmul.f32 %v208, %v203
        %s211 = sld [smem:[#allocation2 + $0x1]]
        %v212 = vstv %s211
        %v213 = vmul.f32 %v212, %v205
        %v214 = vmul.f32 %v212, %v206
        %v215 = vadd.f32 %v209, %v213
        %v216 = vadd.f32 %v210, %v214
        %s217 = sld [smem:[#allocation2 + $0x2]]
        %v218 = vstv %s217
        %v219 = vadd.f32 %v215, %v218
        %v220 = vadd.f32 %v216, %v218
        %221 = vst [vmem:[%s199] sm:$0xff] %v219
        %222 = vst [vmem:[%s199 + $0x8] sm:$0xff] %v220
        %s223 = sld [smem:[#allocation2 + $0x80]]
        %v224 = vstv %s223
        %v225 = vmul.f32 %v224, %v202
        %v226 = vmul.f32 %v224, %v203
        %s227 = sld [smem:[#allocation2 + $0x81]]
        %v228 = vstv %s227
        %v229 = vmul.f32 %v228, %v205
        %v230 = vmul.f32 %v228, %v206
        %v231 = vadd.f32 %v225, %v229
        %v232 = vadd.f32 %v226, %v230
        %s233 = sld [smem:[#allocation2 + $0x82]]
        %v234 = vstv %s233
        %v235 = vadd.f32 %v231, %v234
        %v236 = vadd.f32 %v232, %v234
        %s237 = scalar_lea.vmem %s199, 16 [#allocation5]
        %238 = vst [vmem:[%s237] sm:$0xff] %v235
        %239 = vst [vmem:[%s237 + $0x8] sm:$0xff] %v236
        %s240 = sand.u32 %s69, 1
        %s241 = sand.u32 %s69, 1
        %s242 = smul.addr %s241, 32
        %s243 = scalar_lea.vmem [#allocation5], %s242
        // Predicated region
        $region71: #{camera_to_camera_batched.1} parent=61 // pred_check
          %p244 = pneg %p79
        $region72: #{camera_to_camera_batched.1} parent=61 // pred_check_branch
          %246 = sbr.rel (%p244) target = $region74
        $region73: #{camera_to_camera_batched.1} parent=61 // pred_region
          %s247 = smul.u32 2, %s14
          %s248 = smul.addr %s247, 8
          %s249 = scalar_lea.vmem %s2, %s248
          // Predicated region
          $region75: #{camera_to_camera_batched.1} parent=73 // pred_check
            _
          $region76: #{camera_to_camera_batched.1} parent=73 // pred_check_branch
            %251 = sbr.rel (0) target = $region78
          $region77: #{camera_to_camera_batched.1} parent=73 // pred_region
            // Predicated region
            $region79: #{camera_to_camera_batched.1} parent=77 // pred_check
              _
            $region80: #{camera_to_camera_batched.1} parent=77 // pred_check_branch
              %253 = sbr.rel (0) target = $region82
            $region81: #{camera_to_camera_batched.1} parent=77 // pred_region
              // Predicated region
              $region94: #{camera_to_camera_batched.1} parent=81 // pred_check
                _
              $region95: #{camera_to_camera_batched.1} parent=81 // pred_check_branch
                %275 = sbr.rel (0) target = $region97
              $region96: #{camera_to_camera_batched.1} parent=81 // pred_region
                loop: start=0, step=1, limit=1
                $region98: #{camera_to_camera_batched.1} parent=96 // loop_pre_header
                  _
                $region99: #{camera_to_camera_batched.1} parent=96 // loop_header
                  %s277 = sphi 0, %s281
                  %p278 = scmp.ge.s32.totalorder %s277, 1
                  %s282 = sphi %s243, %s243
                  %s283 = sphi %s249, %s249
                $region100: #{camera_to_camera_batched.1} parent=96 // loop_header_branch
                  %280 = sbr.rel (%p278) target = $region104
                $region101: #{camera_to_camera_batched.1} parent=96 // loop_body
                  %v284 = vld [vmem:[%s282] sm:$0xff]
                  %285 = vst [vmem:[%s283] sm:$0xff] %v284
                  %v286 = vld [vmem:[%s282 + $0x8] sm:$0xff]
                  %287 = vst [vmem:[%s283 + $0x8] sm:$0xff] %v286
                  %v288 = vld [vmem:[%s282 + $0x10] sm:$0xff]
                  %289 = vst [vmem:[%s283 + $0x40] sm:$0xff] %v288
                  %v290 = vld [vmem:[%s282 + $0x18] sm:$0xff]
                  %291 = vst [vmem:[%s283 + $0x48] sm:$0xff] %v290
                $region102: #{camera_to_camera_batched.1} parent=96 // loop_footer
                  %s281 = sadd.s32 1, %s277
                $region103: #{camera_to_camera_batched.1} parent=96 // loop_footer_branch
                  %276 = sbr.rel target = $region99
                $region104: #{camera_to_camera_batched.1} parent=96 // loop_exit
                  _
              $region97: #{camera_to_camera_batched.1} parent=81 // pred_fallthru
                _
              // Predicated region
              $region105: #{camera_to_camera_batched.1} parent=81 // pred_check
                _
              $region106: #{camera_to_camera_batched.1} parent=81 // pred_check_branch
                %293 = sbr.rel target = $region108
              $region107: #{camera_to_camera_batched.1} parent=81 // pred_region
                _
              $region108: #{camera_to_camera_batched.1} parent=81 // pred_fallthru
                _
            $region82: #{camera_to_camera_batched.1} parent=77 // pred_fallthru
              _
            // Predicated region
            $region83: #{camera_to_camera_batched.1} parent=77 // pred_check
              _
            $region84: #{camera_to_camera_batched.1} parent=77 // pred_check_branch
              %255 = sbr.rel target = $region86
            $region85: #{camera_to_camera_batched.1} parent=77 // pred_region
              %s257 = ssub.s32 256, 1
              loop: start=0, step=1, limit=1
              $region87: #{camera_to_camera_batched.1} parent=85 // loop_pre_header
                _
              $region88: #{camera_to_camera_batched.1} parent=85 // loop_header
                %s259 = sphi 0, %s263
                %p260 = scmp.ge.s32.totalorder %s259, 1
                %s264 = sphi %s243, %s243
                %s265 = sphi %s249, %s249
              $region89: #{camera_to_camera_batched.1} parent=85 // loop_header_branch
                %262 = sbr.rel (%p260) target = $region93
              $region90: #{camera_to_camera_batched.1} parent=85 // loop_body
                %v266 = vld [vmem:[%s264] sm:%s257]
                %267 = vst [vmem:[%s265] sm:%s257] %v266
                %v268 = vld [vmem:[%s264 + $0x8] sm:%s257]
                %269 = vst [vmem:[%s265 + $0x8] sm:%s257] %v268
                %v270 = vld [vmem:[%s264 + $0x10] sm:%s257]
                %271 = vst [vmem:[%s265 + $0x40] sm:%s257] %v270
                %v272 = vld [vmem:[%s264 + $0x18] sm:%s257]
                %273 = vst [vmem:[%s265 + $0x48] sm:%s257] %v272
              $region91: #{camera_to_camera_batched.1} parent=85 // loop_footer
                %s263 = sadd.s32 1, %s259
              $region92: #{camera_to_camera_batched.1} parent=85 // loop_footer_branch
                %258 = sbr.rel target = $region88
              $region93: #{camera_to_camera_batched.1} parent=85 // loop_exit
                _
            $region86: #{camera_to_camera_batched.1} parent=77 // pred_fallthru
              _
          $region78: #{camera_to_camera_batched.1} parent=73 // pred_fallthru
            _
          %294 = vnop
        $region74: #{camera_to_camera_batched.1} parent=61 // pred_fallthru
          _
      $region62: #{camera_to_camera_batched.1} parent=5 // pred_fallthru
        _
      %p295 = scmp.le.s32.totalorder 2, %s9
      // Predicated region
      $region109: #{camera_to_camera_batched.1} parent=5 // pred_check
        %p296 = pneg %p295
      $region110: #{camera_to_camera_batched.1} parent=5 // pred_check_branch
        %298 = sbr.rel (%p296) target = $region112
      $region111: #{camera_to_camera_batched.1} parent=5 // pred_region
        %s299 = ssub.s32 %s9, 2
        // Predicated region
        $region113: #{camera_to_camera_batched.1} parent=111 // pred_check
          %p300 = pneg %p85
        $region114: #{camera_to_camera_batched.1} parent=111 // pred_check_branch
          %302 = sbr.rel (%p300) target = $region116
        $region115: #{camera_to_camera_batched.1} parent=111 // pred_region
          %s303 = sand.u32 %s70, 1
          %s304 = sand.u32 %s70, 1
          %s305 = smul.addr %s304, 32
          %s306 = scalar_lea.vmem [#allocation5], %s305
        $region116: #{camera_to_camera_batched.1} parent=111 // pred_fallthru
          _
      $region112: #{camera_to_camera_batched.1} parent=5 // pred_fallthru
        _
    $region6: #{camera_to_camera_batched.1} parent=1 // loop_footer
      %s13 = sadd.s32 1, %s9
    $region7: #{camera_to_camera_batched.1} parent=1 // loop_footer_branch
      %8 = sbr.rel target = $region3
    $region8: #{camera_to_camera_batched.1} parent=1 // loop_exit
      _
    %307 = vsyncpa [#allocation3], 1
    %s308 = scalar_lea.sflag [#allocation3], 1
    %309 = vsyncpa %s308, 1

</llo_original>
